<compile_context>
chip_gen: v6e
topology: v6e:2x2x1
jax: 0.10.0
libtpu: 0.0.40
codegen_flags: <defaults>
</compile_context>

<pallas_src>
import jax
import jax.numpy as jnp
from jax import lax
from jax.experimental import pallas as pl
from jax.experimental.pallas import tpu as pltpu

THRESHOLD = 0.5
DT = 1.0
DECAY = 0.99


def _round_up(x, m):
    return ((x + m - 1) // m) * m


def _pad2(a, rows, cols):
    return jnp.pad(a, ((0, rows - a.shape[0]), (0, cols - a.shape[1])))


def _make_kernel(with_trace):
    def kernel(*refs):
        if with_trace:
            x_ref, tr_ref, w_ref, s_ref, dw_ref, acc_ref = refs
        else:
            x_ref, w_ref, s_ref, dw_ref, acc_ref = refs
            tr_ref = x_ref  # fresh module: trace == x, reuse the same VMEM tile

        b = pl.program_id(1)  # batch (reduction) axis, innermost

        @pl.when(b == 0)
        def _init():
            acc_ref[...] = jnp.zeros_like(acc_ref)

        # summed input current through both CustomLinear connections (one MXU matmul)
        cur = jnp.dot(x_ref[...], w_ref[...], preferred_element_type=jnp.float32)

        # IFNode: mem = 0 + cur*dt ; spike = heaviside(mem - threshold)
        spike = (cur * DT - THRESHOLD >= 0.0).astype(jnp.float32)
        s_ref[...] = spike

        # STDP update: dw += trace^T @ spike, expressed as a batch-contraction
        # (no explicit transpose -> no XLU relayout before the MXU).
        acc_ref[...] += lax.dot_general(
            tr_ref[...], spike,
            dimension_numbers=(((0,), (0,)), ((), ())),
            preferred_element_type=jnp.float32)

        @pl.when(b == pl.num_programs(1) - 1)
        def _finalize():
            dw_ref[...] = acc_ref[...]

    return kernel


def two_in_one_out(x1, x2, w1, w2, trace1=None, trace2=None, decay=DECAY):
    """Forward of TwoInOneOut.

    Returns (spike, (dw1, dw2), (new_trace1, new_trace2)).
    trace1/trace2 are the persistent STDP traces (None == fresh module state).
    """
    x1 = jnp.asarray(x1, jnp.float32)
    x2 = jnp.asarray(x2, jnp.float32)
    w1 = jnp.asarray(w1, jnp.float32)
    w2 = jnp.asarray(w2, jnp.float32)

    B, N1 = x1.shape
    _, N2 = x2.shape
    M = w1.shape[1]
    N = N1 + N2

    with_trace = trace1 is not None
    # persistent STDP traces (module state); first call: trace == x
    new_tr1 = x1 if not with_trace else decay * trace1 + x1
    new_tr2 = x2 if not with_trace else decay * trace2 + x2
    # TODO(synk): the decay*trace+x state update stays as one XLA elementwise op; storing
    # the new trace from inside the kernel conflicts with the dw-accumulator grid order
    # (batch innermost) — revisited output blocks would not be consecutive.

    # fuse the two connections: one (B, N1+N2) @ (N1+N2, M) matmul
    x_cat = jnp.concatenate([x1, x2], axis=1)
    w_cat = jnp.concatenate([w1, w2], axis=0)

    # tile sizes / padding to TPU-friendly shapes
    tm = 256 if (M >= 256 and M % 256 == 0) else 128
    m_pad = _round_up(M, tm)
    tb = 256 if B >= 256 else _round_up(B, 8)
    b_pad = _round_up(B, tb)
    n_pad = _round_up(N, 8)
    # NOTE: the contraction dim N stays untiled (whole w tile resident); fine for the
    # feature sizes this module targets.

    x_p = _pad2(x_cat, b_pad, n_pad)
    w_p = _pad2(w_cat, n_pad, m_pad)

    num_m = m_pad // tm
    num_b = b_pad // tb

    x_spec = pl.BlockSpec((tb, n_pad), lambda m, b: (b, 0))
    w_spec = pl.BlockSpec((n_pad, tm), lambda m, b: (0, m))
    if with_trace:
        tr_cat = jnp.concatenate([new_tr1, new_tr2], axis=1)
        operands = (x_p, _pad2(tr_cat, b_pad, n_pad), w_p)
        in_specs = [x_spec, x_spec, w_spec]
    else:
        operands = (x_p, w_p)
        in_specs = [x_spec, w_spec]

    out_specs = (
        pl.BlockSpec((tb, tm), lambda m, b: (b, m)),      # spike
        pl.BlockSpec((n_pad, tm), lambda m, b: (0, m)),   # dw (resident across b)
    )
    out_shape = (
        jax.ShapeDtypeStruct((b_pad, m_pad), jnp.float32),
        jax.ShapeDtypeStruct((n_pad, m_pad), jnp.float32),
    )

    # explicit VMEM budget: double-buffered in/out tiles + f32 accumulator + headroom
    in_elems = tb * n_pad * (2 if with_trace else 1) + n_pad * tm
    out_elems = tb * tm + n_pad * tm
    est_bytes = 4 * (2 * (in_elems + out_elems) + n_pad * tm)
    vmem_bytes = int(min(max(est_bytes + (4 << 20), 16 << 20), 64 << 20))

    spike_p, dw_p = pl.pallas_call(
        _make_kernel(with_trace),
        out_shape=out_shape,
        grid_spec=pltpu.PrefetchScalarGridSpec(
            num_scalar_prefetch=0,
            grid=(num_m, num_b),
            in_specs=in_specs,
            out_specs=out_specs,
            scratch_shapes=[pltpu.VMEM((n_pad, tm), jnp.float32)],
        ),
        compiler_params=pltpu.CompilerParams(
            dimension_semantics=("parallel", "arbitrary"),
            vmem_limit_bytes=vmem_bytes,
        ),
    )(*operands)

    spike = spike_p[:B, :M]
    dw_cat = dw_p[:N, :M]
    dw1 = dw_cat[:N1]
    dw2 = dw_cat[N1:]
    return spike, (dw1, dw2), (new_tr1, new_tr2)


def _reference(x1, x2, w1, w2, tr1, tr2):
    cur = x1 @ w1 + x2 @ w2
    spike = (cur * DT - THRESHOLD >= 0.0).astype(jnp.float32)
    dw1 = tr1.T @ spike
    dw2 = tr2.T @ spike
    return spike, dw1, dw2


if __name__ == "__main__":
    key = jax.random.PRNGKey(0)
    k1, k2, k3, k4, k5, k6 = jax.random.split(key, 6)

    B, N1, N2, M = 8, 16, 32, 96  # small, deliberately non-128-aligned (padded inside)
    x1 = jax.random.uniform(k1, (B, N1), dtype=jnp.float32)
    x2 = jax.random.uniform(k2, (B, N2), dtype=jnp.float32)
    w1 = 0.1 * jax.random.normal(k3, (N1, M), dtype=jnp.float32)
    w2 = 0.1 * jax.random.normal(k4, (N2, M), dtype=jnp.float32)

    # --- step 1: fresh module (trace == x) ---
    spike, (dw1, dw2), (tr1, tr2) = two_in_one_out(x1, x2, w1, w2)
    jax.block_until_ready((spike, dw1, dw2))

    ref_s, ref_dw1, ref_dw2 = _reference(x1, x2, w1, w2, x1, x2)
    assert jnp.array_equal(spike, ref_s), "spike mismatch (step 1)"
    assert jnp.allclose(dw1, ref_dw1, atol=1e-4), "dw1 mismatch (step 1)"
    assert jnp.allclose(dw2, ref_dw2, atol=1e-4), "dw2 mismatch (step 1)"

    # --- step 2: persistent-trace path (trace = decay*trace + x) ---
    x1b = jax.random.uniform(k5, (B, N1), dtype=jnp.float32)
    x2b = jax.random.uniform(k6, (B, N2), dtype=jnp.float32)
    spike2, (dw1b, dw2b), _ = two_in_one_out(x1b, x2b, w1, w2, trace1=tr1, trace2=tr2)
    jax.block_until_ready((spike2, dw1b, dw2b))

    tr1_ref = DECAY * tr1 + x1b
    tr2_ref = DECAY * tr2 + x2b
    ref_s2, ref_dw1b, ref_dw2b = _reference(x1b, x2b, w1, w2, tr1_ref, tr2_ref)
    assert jnp.array_equal(spike2, ref_s2), "spike mismatch (step 2)"
    assert jnp.allclose(dw1b, ref_dw1b, atol=1e-4), "dw1 mismatch (step 2)"
    assert jnp.allclose(dw2b, ref_dw2b, atol=1e-4), "dw2 mismatch (step 2)"

    print("KERNEL_OK")
</pallas_src>

<mosaic_0001>
module attributes {stable_mosaic.version = 11 : i64} {
  func.func @kernel(%arg0: i32, %arg1: i32, %arg2: memref<8x48xf32, #tpu.memory_space<vmem>>, %arg3: memref<48x128xf32, #tpu.memory_space<vmem>>, %arg4: memref<8x128xf32, #tpu.memory_space<vmem>>, %arg5: memref<48x128xf32, #tpu.memory_space<vmem>>, %arg6: memref<48x128xf32, #tpu.memory_space<vmem>>) attributes {dimension_semantics = [#tpu.dimension_semantics<parallel>, #tpu.dimension_semantics<arbitrary>], iteration_bounds = array<i64: 1, 1>, scalar_prefetch = 0 : i64, scratch_operands = 1 : i64, tpu.core_type = #tpu.core_type<tc>, window_params = [{transform_indices = @transform_0, window_bounds = array<i64: 8, 48>}, {transform_indices = @transform_1, window_bounds = array<i64: 48, 128>}, {transform_indices = @transform_2, window_bounds = array<i64: 8, 128>}, {transform_indices = @transform_3, window_bounds = array<i64: 48, 128>}]} {
    %c0_i32 = arith.constant 0 : i32
    %0 = arith.cmpi eq, %arg1, %c0_i32 : i32
    %1 = arith.extui %0 : i1 to i32
    %c0_i32_0 = arith.constant 0 : i32
    %2 = arith.cmpi ne, %1, %c0_i32_0 : i32
    scf.if %2 {
      %cst_18 = arith.constant 0.000000e+00 : f32
      %23 = vector.broadcast %cst_18 : f32 to vector<48x128xf32>
      %c0_19 = arith.constant 0 : index
      %c0_20 = arith.constant 0 : index
      %24 = vector.load %arg6[%c0_19, %c0_20] : memref<48x128xf32, #tpu.memory_space<vmem>>, vector<48x128xf32>
      tpu.vector_store %arg6[%c0_19, %c0_20], %23 {strides = array<i32>} : memref<48x128xf32, #tpu.memory_space<vmem>>, vector<48x128xf32>,
    } else {
    }
    %c0 = arith.constant 0 : index
    %c0_1 = arith.constant 0 : index
    %3 = vector.load %arg2[%c0, %c0_1] : memref<8x48xf32, #tpu.memory_space<vmem>>, vector<8x48xf32>
    %c0_2 = arith.constant 0 : index
    %c0_3 = arith.constant 0 : index
    %4 = vector.load %arg3[%c0_2, %c0_3] : memref<48x128xf32, #tpu.memory_space<vmem>>, vector<48x128xf32>
    %cst = arith.constant dense<0.000000e+00> : vector<8x128xf32>
    %5 = tpu.matmul %3, %4, %cst {dimension_numbers = #tpu.dot_dimension_numbers<[1], [0], [0], [1], [0, 0, 1, 1], [], []>} : vector<8x48xf32>, vector<48x128xf32>, vector<8x128xf32> -> vector<8x128xf32>
    %cst_4 = arith.constant 1.000000e+00 : f32
    %6 = vector.broadcast %cst_4 : f32 to vector<8x128xf32>
    %7 = arith.mulf %5, %6 : vector<8x128xf32>
    %cst_5 = arith.constant 5.000000e-01 : f32
    %8 = vector.broadcast %cst_5 : f32 to vector<8x128xf32>
    %9 = arith.subf %7, %8 : vector<8x128xf32>
    %cst_6 = arith.constant 0.000000e+00 : f32
    %10 = vector.broadcast %cst_6 : f32 to vector<8x128xf32>
    %11 = arith.cmpf oge, %9, %10 : vector<8x128xf32>
    %12 = arith.extui %11 : vector<8x128xi1> to vector<8x128xi32>
    %13 = arith.sitofp %12 : vector<8x128xi32> to vector<8x128xf32>
    %c0_7 = arith.constant 0 : index
    %c0_8 = arith.constant 0 : index
    %14 = vector.load %arg4[%c0_7, %c0_8] : memref<8x128xf32, #tpu.memory_space<vmem>>, vector<8x128xf32>
    tpu.vector_store %arg4[%c0_7, %c0_8], %13 {strides = array<i32>} : memref<8x128xf32, #tpu.memory_space<vmem>>, vector<8x128xf32>,
    %c0_9 = arith.constant 0 : index
    %c0_10 = arith.constant 0 : index
    %15 = vector.load %arg6[%c0_9, %c0_10] : memref<48x128xf32, #tpu.memory_space<vmem>>, vector<48x128xf32>
    %c0_11 = arith.constant 0 : index
    %c0_12 = arith.constant 0 : index
    %16 = vector.load %arg2[%c0_11, %c0_12] : memref<8x48xf32, #tpu.memory_space<vmem>>, vector<8x48xf32>
    %cst_13 = arith.constant dense<0.000000e+00> : vector<48x128xf32>
    %17 = tpu.matmul %16, %13, %cst_13 {dimension_numbers = #tpu.dot_dimension_numbers<[0], [0], [1], [1], [0, 1, 1, 1], [], []>} : vector<8x48xf32>, vector<8x128xf32>, vector<48x128xf32> -> vector<48x128xf32>
    %18 = arith.addf %15, %17 : vector<48x128xf32>
    %c0_14 = arith.constant 0 : index
    %c0_15 = arith.constant 0 : index
    %19 = vector.load %arg6[%c0_14, %c0_15] : memref<48x128xf32, #tpu.memory_space<vmem>>, vector<48x128xf32>
    tpu.vector_store %arg6[%c0_14, %c0_15], %18 {strides = array<i32>} : memref<48x128xf32, #tpu.memory_space<vmem>>, vector<48x128xf32>,
    %c0_i32_16 = arith.constant 0 : i32
    %20 = arith.cmpi eq, %arg1, %c0_i32_16 : i32
    %21 = arith.extui %20 : i1 to i32
    %c0_i32_17 = arith.constant 0 : i32
    %22 = arith.cmpi ne, %21, %c0_i32_17 : i32
    scf.if %22 {
      %c0_18 = arith.constant 0 : index
      %c0_19 = arith.constant 0 : index
      %23 = vector.load %arg6[%c0_18, %c0_19] : memref<48x128xf32, #tpu.memory_space<vmem>>, vector<48x128xf32>
      %c0_20 = arith.constant 0 : index
      %c0_21 = arith.constant 0 : index
      %24 = vector.load %arg5[%c0_20, %c0_21] : memref<48x128xf32, #tpu.memory_space<vmem>>, vector<48x128xf32>
      tpu.vector_store %arg5[%c0_20, %c0_21], %23 {strides = array<i32>} : memref<48x128xf32, #tpu.memory_space<vmem>>, vector<48x128xf32>,
    } else {
    }
    return
  }
  func.func @transform_0(%arg0: i32, %arg1: i32) -> (i32, i32) {
    %c0_i32 = arith.constant 0 : i32
    %c0_i32_0 = arith.constant 0 : i32
    return %arg1, %c0_i32 : i32, i32
  }
  func.func @transform_1(%arg0: i32, %arg1: i32) -> (i32, i32) {
    %c0_i32 = arith.constant 0 : i32
    %c0_i32_0 = arith.constant 0 : i32
    return %c0_i32, %arg0 : i32, i32
  }
  func.func @transform_2(%arg0: i32, %arg1: i32) -> (i32, i32) {
    %c0_i32 = arith.constant 0 : i32
    return %arg1, %arg0 : i32, i32
  }
  func.func @transform_3(%arg0: i32, %arg1: i32) -> (i32, i32) {
    %c0_i32 = arith.constant 0 : i32
    %c0_i32_0 = arith.constant 0 : i32
    return %c0_i32, %arg0 : i32, i32
  }
}

</mosaic_0001>

<llo_original>
// kernel: tpu_custom_call.1
$region0: #{tpu_custom_call.1}
  #allocation0 [shape = 'u32[]', space=smem, size = 0x4, offset = 0x4, fixed_abs, tag = 'smem constant byte address 0x4 - core index']
  #allocation1 [shape = 'u32[144,128]{1,0:T(1,128)}', space=vmem, size = 0x12000, scoped, tag = 'internal scratch']
  #allocation2 [shape = 'f32[48,128]{1,0:T(8,128)}', space=vmem, size = 0x6000, scoped, tag = 'scratch operand']
  %s0 = inlined_call_operand.hbm [shape: f32[8,48], index: 0, kind: input, shape index: {}]
  %s1 = inlined_call_operand.hbm [shape: f32[48,128], index: 1, kind: input, shape index: {}]
  %s2 = inlined_call_operand.hbm [shape: f32[8,128], index: 2, kind: output, shape index: {0}]
  %s3 = inlined_call_operand.hbm [shape: f32[48,128], index: 3, kind: output, shape index: {1}]
  %4 = xla_tuple %s2, %s3
  %s5 = sld [smem:[#allocation0]]
  $region42: #{tpu_custom_call.1} parent=0
    _
  %s7 = ssub.s32 1, %s5
  %s8 = scalar_select 0, %s7, %s5
  $region1: #{tpu_custom_call.1} parent=0
    #allocation3 [shape = 'u8[4096]{0}', space=vmem, size = 0x1000, scoped, tag = 'input window, operand 0, single buffered']
    #allocation4 [shape = 's32[1]{0}', space=sflag, size = 0x4, scoped, tag = 'scoped memory for tpu_custom_call.1']
    #allocation5 [shape = 's32[1]{0}', space=sflag, size = 0x4, scoped, tag = 'scoped memory for tpu_custom_call.1']
    #allocation6 [shape = 'u8[24576]{0}', space=vmem, size = 0x6000, scoped, tag = 'input window, operand 1, single buffered']
    #allocation7 [shape = 's32[1]{0}', space=sflag, size = 0x4, scoped, tag = 'scoped memory for tpu_custom_call.1']
    #allocation8 [shape = 'u8[4096]{0}', space=vmem, size = 0x1000, scoped, tag = 'output window, operand 0, single buffered']
    #allocation9 [shape = 'u8[24576]{0}', space=vmem, size = 0x6000, scoped, tag = 'output window, operand 1, single buffered']
    #allocation10 [shape = 's32[1]{0}', space=sflag, size = 0x4, scoped, tag = 'scoped memory for tpu_custom_call.1']
    %9 = vsyncpa [#allocation4], 0
    %10 = vsyncpa [#allocation7], 0
    %11 = vsyncpa [#allocation5], 0
    %12 = vsyncpa [#allocation10], 0
    // Predicated region
    $region2: #{tpu_custom_call.1} parent=1 // pred_check
      _
    $region3: #{tpu_custom_call.1} parent=1 // pred_check_branch
      %14 = sbr.rel (0) target = $region5
    $region4: #{tpu_custom_call.1} parent=1 // pred_region
      %s16 = ssub.s32 128, 128
      %17 = vsyncadd [#allocation4], %s16
      %s19 = sshll.u32 [#allocation3], 4
      %s20 = int_to_ptr.vmem [resolvable:$true] %s19
      %22 = dma.hbm_to_vmem [thread:$0]  %s0, 128, %s20, [#allocation4]
    $region5: #{tpu_custom_call.1} parent=1 // pred_fallthru
      _
    // Predicated region
    $region6: #{tpu_custom_call.1} parent=1 // pred_check
      _
    $region7: #{tpu_custom_call.1} parent=1 // pred_check_branch
      %24 = sbr.rel (0) target = $region9
    $region8: #{tpu_custom_call.1} parent=1 // pred_region
      %s26 = ssub.s32 768, 768
      %27 = vsyncadd [#allocation7], %s26
      %s28 = sshll.u32 [#allocation6], 4
      %s29 = int_to_ptr.vmem [resolvable:$true] %s28
      %34 = dma.hbm_to_vmem [thread:$0]  %s1, 768, %s29, [#allocation7], 128, 128, 8
    $region9: #{tpu_custom_call.1} parent=1 // pred_fallthru
      _
    // Predicated region
    $region10: #{tpu_custom_call.1} parent=1 // pred_check
      _
    $region11: #{tpu_custom_call.1} parent=1 // pred_check_branch
      %36 = sbr.rel (0) target = $region13
    $region12: #{tpu_custom_call.1} parent=1 // pred_region
      %37 = dma.done [#allocation4], 128
    $region13: #{tpu_custom_call.1} parent=1 // pred_fallthru
      _
    // Predicated region
    $region14: #{tpu_custom_call.1} parent=1 // pred_check
      _
    $region15: #{tpu_custom_call.1} parent=1 // pred_check_branch
      %39 = sbr.rel (0) target = $region17
    $region16: #{tpu_custom_call.1} parent=1 // pred_region
      %40 = dma.done [#allocation7], 768
    $region17: #{tpu_custom_call.1} parent=1 // pred_fallthru
      _
    %p41 = scmp.eq.s32.totalorder 0, 0
    // Predicated region
    $region18: #{tpu_custom_call.1} parent=1 // pred_check
      %p42 = pneg %p41
    $region19: #{tpu_custom_call.1} parent=1 // pred_check_branch
      %44 = sbr.rel (%p42) target = $region21
    $region20: #{tpu_custom_call.1} parent=1 // pred_region
      %45 = vst [vmem:[#allocation2] sm:$0xff] 0.0
      %46 = vst [vmem:[#allocation2 + $0x8] sm:$0xff] 0.0
      %47 = vst [vmem:[#allocation2 + $0x10] sm:$0xff] 0.0
      %48 = vst [vmem:[#allocation2 + $0x18] sm:$0xff] 0.0
      %49 = vst [vmem:[#allocation2 + $0x20] sm:$0xff] 0.0
      %50 = vst [vmem:[#allocation2 + $0x28] sm:$0xff] 0.0
    $region21: #{tpu_custom_call.1} parent=1 // pred_fallthru
      _
    %v51 = vld [vmem:[#allocation3] sm:$0xff]
    %v52 = vld [vmem:[#allocation6] sm:$0xff]
    %v53 = vld [vmem:[#allocation6 + $0x8] sm:$0xff]
    %v54 = vld [vmem:[#allocation6 + $0x10] sm:$0xff]
    %v55 = vld [vmem:[#allocation6 + $0x18] sm:$0xff]
    %v56 = vld [vmem:[#allocation6 + $0x20] sm:$0xff]
    %v57 = vld [vmem:[#allocation6 + $0x28] sm:$0xff]
    %vm58 = vcmask 392192
    %v60 = vsel %vm58, %v51, 0
    %62 = vmatprep.subr.mxu0 0.0
    %63 = vmatpush1.msra.mxu0 0.0
    %64 = vmatprep.subr.mxu0 0.0
    %65 = vmatpush1.msra.mxu0 0.0
    %66 = vmatprep.subr.mxu0 0.0
    %67 = vmatpush1.msra.mxu0 0.0
    %68 = vmatprep.subr.mxu0 0.0
    %69 = vmatpush1.msra.mxu0 0.0
    %70 = vmatprep.subr.mxu0 0.0
    %71 = vmatpush1.msra.mxu0 0.0
    %72 = vmatprep.subr.mxu0 0.0
    %73 = vmatpush1.msra.mxu0 0.0
    %74 = vmatprep.subr.mxu0 0.0
    %75 = vmatpush1.msra.mxu0 0.0
    %76 = vmatprep.subr.mxu0 0.0
    %77 = vmatpush1.msra.mxu0 0.0
    %78 = vmatprep.subr.mxu0 0.0
    %79 = vmatpush1.msra.mxu0 0.0
    %80 = vmatprep.subr.mxu0 0.0
    %81 = vmatpush1.msra.mxu0 0.0
    %82 = vmatprep.subr.mxu0 0.0
    %83 = vmatpush1.msra.mxu0 %v57
    %84 = vmatprep.subr.mxu0 0.0
    %85 = vmatpush1.msra.mxu0 %v56
    %86 = vmatprep.subr.mxu0 0.0
    %87 = vmatpush1.msra.mxu0 %v55
    %88 = vmatprep.subr.mxu0 0.0
    %89 = vmatpush1.msra.mxu0 %v54
    %90 = vmatprep.subr.mxu0 0.0
    %91 = vmatpush1.msra.mxu0 %v53
    %92 = vmatprep.subr.mxu0 0.0
    %93 = vmatpush1.msra.mxu0 %v52
    %94 = vmatprep.subr.mxu0 0.0
    %95 = vmatpush2.msra.mxu0 0.0
    %96 = vmatprep.subr.mxu0 0.0
    %97 = vmatpush2.msra.mxu0 0.0
    %98 = vmatprep.subr.mxu0 0.0
    %99 = vmatpush2.msra.mxu0 0.0
    %100 = vmatprep.subr.mxu0 0.0
    %101 = vmatpush2.msra.mxu0 0.0
    %102 = vmatprep.subr.mxu0 0.0
    %103 = vmatpush2.msra.mxu0 0.0
    %104 = vmatprep.subr.mxu0 0.0
    %105 = vmatpush2.msra.mxu0 0.0
    %106 = vmatprep.subr.mxu0 0.0
    %107 = vmatpush2.msra.mxu0 0.0
    %108 = vmatprep.subr.mxu0 0.0
    %109 = vmatpush2.msra.mxu0 0.0
    %110 = vmatprep.subr.mxu0 0.0
    %111 = vmatpush2.msra.mxu0 0.0
    %112 = vmatprep.subr.mxu0 0.0
    %113 = vmatpush2.msra.mxu0 0.0
    %114 = vmatprep.subr.mxu0 0.0
    %115 = vmatpush2.msra.mxu0 0.0
    %116 = vmatprep.subr.mxu0 0.0
    %117 = vmatpush2.msra.mxu0 0.0
    %118 = vmatprep.subr.mxu0 0.0
    %119 = vmatpush2.msra.mxu0 0.0
    %120 = vmatprep.subr.mxu0 0.0
    %121 = vmatpush2.msra.mxu0 0.0
    %122 = vmatprep.subr.mxu0 0.0
    %123 = vmatpush2.msra.mxu0 0.0
    %124 = vmatprep.subr.mxu0 0.0
    %125 = vmatpush2.msra.mxu0 0.0
    %126 = vmatprep.mubr.f32.mxu0 0.0
    %127 = vmatmul.mubr.f32.gmra.mxu0 %v60
    %v128 = vpop.f32.mrf.mxu0
    %v129 = vadd.f32 0.0, %v128
    %v130 = vpop.f32.mrf.mxu0
    %131 = vdwg.mxu0
    %v132 = vsub.f32 %v129, 0.5
    %vm133 = vcmp.ge.f32.partialorder %v132, 0.0
    %v134 = vsel %vm133, 1, 0
    %v135 = vcvt.s32.f32 %v134
    %136 = vst [vmem:[#allocation8] sm:$0xff] %v135
    %v137 = vld [vmem:[#allocation2] sm:$0xff]
    %v138 = vld [vmem:[#allocation2 + $0x8] sm:$0xff]
    %v139 = vld [vmem:[#allocation2 + $0x10] sm:$0xff]
    %v140 = vld [vmem:[#allocation2 + $0x18] sm:$0xff]
    %v141 = vld [vmem:[#allocation2 + $0x20] sm:$0xff]
    %v142 = vld [vmem:[#allocation2 + $0x28] sm:$0xff]
    %v143 = vld [vmem:[#allocation3] sm:$0xff]
    %144 = vxpose.xlu0.b32.start [1/16] %v143, 128
    %145 = vxpose.xlu0.b32.cont [2/16] 0.0, 128
    %146 = vxpose.xlu0.b32.cont [3/16] 0.0, 128
    %147 = vxpose.xlu0.b32.cont [4/16] 0.0, 128
    %148 = vxpose.xlu0.b32.cont [5/16] 0.0, 128
    %149 = vxpose.xlu0.b32.cont [6/16] 0.0, 128
    %150 = vxpose.xlu0.b32.cont [7/16] 0.0, 128
    %151 = vxpose.xlu0.b32.cont [8/16] 0.0, 128
    %152 = vxpose.xlu0.b32.cont [9/16] 0.0, 128
    %153 = vxpose.xlu0.b32.cont [10/16] 0.0, 128
    %154 = vxpose.xlu0.b32.cont [11/16] 0.0, 128
    %155 = vxpose.xlu0.b32.cont [12/16] 0.0, 128
    %156 = vxpose.xlu0.b32.cont [13/16] 0.0, 128
    %157 = vxpose.xlu0.b32.cont [14/16] 0.0, 128
    %158 = vxpose.xlu0.b32.cont [15/16] 0.0, 128
    %159 = vxpose.xlu0.b32.end [16/16] 0.0, 128
    %v160 = vpop.trf.xlu0
    %v161 = vpop.trf.xlu0
    %v162 = vpop.trf.xlu0
    %v163 = vpop.trf.xlu0
    %v164 = vpop.trf.xlu0
    %v165 = vpop.trf.xlu0
    %v166 = vpop.trf.xlu0
    %v167 = vpop.trf.xlu0
    %v168 = vpop.trf.xlu0
    %v169 = vpop.trf.xlu0
    %v170 = vpop.trf.xlu0
    %v171 = vpop.trf.xlu0
    %v172 = vpop.trf.xlu0
    %v173 = vpop.trf.xlu0
    %v174 = vpop.trf.xlu0
    %v175 = vpop.trf.xlu0
    %vm176 = vcmask 64512
    %v178 = vsel %vm176, %v160, 0
    %v181 = vsel %vm176, %v161, 0
    %v184 = vsel %vm176, %v162, 0
    %v187 = vsel %vm176, %v163, 0
    %v190 = vsel %vm176, %v164, 0
    %v193 = vsel %vm176, %v165, 0
    %195 = vmatprep.subr.mxu0 0.0
    %196 = vmatpush1.msra.mxu0 0.0
    %197 = vmatprep.subr.mxu0 0.0
    %198 = vmatpush1.msra.mxu0 0.0
    %199 = vmatprep.subr.mxu0 0.0
    %200 = vmatpush1.msra.mxu0 0.0
    %201 = vmatprep.subr.mxu0 0.0
    %202 = vmatpush1.msra.mxu0 0.0
    %203 = vmatprep.subr.mxu0 0.0
    %204 = vmatpush1.msra.mxu0 0.0
    %205 = vmatprep.subr.mxu0 0.0
    %206 = vmatpush1.msra.mxu0 0.0
    %207 = vmatprep.subr.mxu0 0.0
    %208 = vmatpush1.msra.mxu0 0.0
    %209 = vmatprep.subr.mxu0 0.0
    %210 = vmatpush1.msra.mxu0 0.0
    %211 = vmatprep.subr.mxu0 0.0
    %212 = vmatpush1.msra.mxu0 0.0
    %213 = vmatprep.subr.mxu0 0.0
    %214 = vmatpush1.msra.mxu0 0.0
    %215 = vmatprep.subr.mxu0 0.0
    %216 = vmatpush1.msra.mxu0 0.0
    %217 = vmatprep.subr.mxu0 0.0
    %218 = vmatpush1.msra.mxu0 0.0
    %219 = vmatprep.subr.mxu0 0.0
    %220 = vmatpush1.msra.mxu0 0.0
    %221 = vmatprep.subr.mxu0 0.0
    %222 = vmatpush1.msra.mxu0 0.0
    %223 = vmatprep.subr.mxu0 0.0
    %224 = vmatpush1.msra.mxu0 0.0
    %225 = vmatprep.subr.mxu0 0.0
    %226 = vmatpush1.msra.mxu0 %v135
    %227 = vmatprep.subr.mxu0 0.0
    %228 = vmatpush2.msra.mxu0 0.0
    %229 = vmatprep.subr.mxu0 0.0
    %230 = vmatpush2.msra.mxu0 0.0
    %231 = vmatprep.subr.mxu0 0.0
    %232 = vmatpush2.msra.mxu0 0.0
    %233 = vmatprep.subr.mxu0 0.0
    %234 = vmatpush2.msra.mxu0 0.0
    %235 = vmatprep.subr.mxu0 0.0
    %236 = vmatpush2.msra.mxu0 0.0
    %237 = vmatprep.subr.mxu0 0.0
    %238 = vmatpush2.msra.mxu0 0.0
    %239 = vmatprep.subr.mxu0 0.0
    %240 = vmatpush2.msra.mxu0 0.0
    %241 = vmatprep.subr.mxu0 0.0
    %242 = vmatpush2.msra.mxu0 0.0
    %243 = vmatprep.subr.mxu0 0.0
    %244 = vmatpush2.msra.mxu0 0.0
    %245 = vmatprep.subr.mxu0 0.0
    %246 = vmatpush2.msra.mxu0 0.0
    %247 = vmatprep.subr.mxu0 0.0
    %248 = vmatpush2.msra.mxu0 0.0
    %249 = vmatprep.subr.mxu0 0.0
    %250 = vmatpush2.msra.mxu0 0.0
    %251 = vmatprep.subr.mxu0 0.0
    %252 = vmatpush2.msra.mxu0 0.0
    %253 = vmatprep.subr.mxu0 0.0
    %254 = vmatpush2.msra.mxu0 0.0
    %255 = vmatprep.subr.mxu0 0.0
    %256 = vmatpush2.msra.mxu0 0.0
    %257 = vmatprep.subr.mxu0 0.0
    %258 = vmatpush2.msra.mxu0 0.0
    %259 = vmatprep.mubr.f32.mxu0 0.0
    %260 = vmatmul.mubr.f32.gmra.mxu0 %v178
    %v261 = vpop.f32.mrf.mxu0
    %v262 = vadd.f32 0.0, %v261
    %v263 = vpop.f32.mrf.mxu0
    %264 = vmatprep.mubr.f32.mxu0 0.0
    %265 = vmatmul.mubr.f32.gmra.mxu0 %v181
    %v266 = vpop.f32.mrf.mxu0
    %v267 = vadd.f32 0.0, %v266
    %v268 = vpop.f32.mrf.mxu0
    %269 = vmatprep.mubr.f32.mxu0 0.0
    %270 = vmatmul.mubr.f32.gmra.mxu0 %v184
    %v271 = vpop.f32.mrf.mxu0
    %v272 = vadd.f32 0.0, %v271
    %v273 = vpop.f32.mrf.mxu0
    %274 = vmatprep.mubr.f32.mxu0 0.0
    %275 = vmatmul.mubr.f32.gmra.mxu0 %v187
    %v276 = vpop.f32.mrf.mxu0
    %v277 = vadd.f32 0.0, %v276
    %v278 = vpop.f32.mrf.mxu0
    %279 = vmatprep.mubr.f32.mxu0 0.0
    %280 = vmatmul.mubr.f32.gmra.mxu0 %v190
    %v281 = vpop.f32.mrf.mxu0
    %v282 = vadd.f32 0.0, %v281
    %v283 = vpop.f32.mrf.mxu0
    %284 = vmatprep.mubr.f32.mxu0 0.0
    %285 = vmatmul.mubr.f32.gmra.mxu0 %v193
    %v286 = vpop.f32.mrf.mxu0
    %v287 = vadd.f32 0.0, %v286
    %v288 = vpop.f32.mrf.mxu0
    %289 = vdwg.mxu0
    %v290 = vadd.f32 %v137, %v262
    %v291 = vadd.f32 %v138, %v267
    %v292 = vadd.f32 %v139, %v272
    %v293 = vadd.f32 %v140, %v277
    %v294 = vadd.f32 %v141, %v282
    %v295 = vadd.f32 %v142, %v287
    %296 = vst [vmem:[#allocation2] sm:$0xff] %v290
    %297 = vst [vmem:[#allocation2 + $0x8] sm:$0xff] %v291
    %298 = vst [vmem:[#allocation2 + $0x10] sm:$0xff] %v292
    %299 = vst [vmem:[#allocation2 + $0x18] sm:$0xff] %v293
    %300 = vst [vmem:[#allocation2 + $0x20] sm:$0xff] %v294
    %301 = vst [vmem:[#allocation2 + $0x28] sm:$0xff] %v295
    // Predicated region
    $region22: #{tpu_custom_call.1} parent=1 // pred_check
      %p302 = pneg %p41
    $region23: #{tpu_custom_call.1} parent=1 // pred_check_branch
      %304 = sbr.rel (%p302) target = $region25
    $region24: #{tpu_custom_call.1} parent=1 // pred_region
      %v305 = vld [vmem:[#allocation2] sm:$0xff]
      %v306 = vld [vmem:[#allocation2 + $0x8] sm:$0xff]
      %v307 = vld [vmem:[#allocation2 + $0x10] sm:$0xff]
      %v308 = vld [vmem:[#allocation2 + $0x18] sm:$0xff]
      %v309 = vld [vmem:[#allocation2 + $0x20] sm:$0xff]
      %v310 = vld [vmem:[#allocation2 + $0x28] sm:$0xff]
      %311 = vst [vmem:[#allocation9] sm:$0xff] %v305
      %312 = vst [vmem:[#allocation9 + $0x8] sm:$0xff] %v306
      %313 = vst [vmem:[#allocation9 + $0x10] sm:$0xff] %v307
      %314 = vst [vmem:[#allocation9 + $0x18] sm:$0xff] %v308
      %315 = vst [vmem:[#allocation9 + $0x20] sm:$0xff] %v309
      %316 = vst [vmem:[#allocation9 + $0x28] sm:$0xff] %v310
    $region25: #{tpu_custom_call.1} parent=1 // pred_fallthru
      _
    // Predicated region
    $region26: #{tpu_custom_call.1} parent=1 // pred_check
      _
    $region27: #{tpu_custom_call.1} parent=1 // pred_check_branch
      %318 = sbr.rel (0) target = $region29
    $region28: #{tpu_custom_call.1} parent=1 // pred_region
      %s320 = ssub.s32 128, 128
      %321 = vsyncadd [#allocation5], %s320
      %s323 = sshll.u32 [#allocation8], 4
      %s324 = int_to_ptr.vmem [resolvable:$true] %s323
      %326 = dma.vmem_to_hbm [thread:$0]  %s324, 128, %s2, [#allocation5]
    $region29: #{tpu_custom_call.1} parent=1 // pred_fallthru
      _
    // Predicated region
    $region30: #{tpu_custom_call.1} parent=1 // pred_check
      _
    $region31: #{tpu_custom_call.1} parent=1 // pred_check_branch
      %328 = sbr.rel (0) target = $region33
    $region32: #{tpu_custom_call.1} parent=1 // pred_region
      %s330 = ssub.s32 768, 768
      %331 = vsyncadd [#allocation10], %s330
      %s332 = sshll.u32 [#allocation9], 4
      %s333 = int_to_ptr.vmem [resolvable:$true] %s332
      %338 = dma.vmem_to_hbm [thread:$0]  %s333, 768, %s3, [#allocation10], 128, 128, 8
    $region33: #{tpu_custom_call.1} parent=1 // pred_fallthru
      _
    // Predicated region
    $region34: #{tpu_custom_call.1} parent=1 // pred_check
      _
    $region35: #{tpu_custom_call.1} parent=1 // pred_check_branch
      %340 = sbr.rel (0) target = $region37
    $region36: #{tpu_custom_call.1} parent=1 // pred_region
      %341 = dma.done [#allocation5], 128
    $region37: #{tpu_custom_call.1} parent=1 // pred_fallthru
      _
    // Predicated region
    $region38: #{tpu_custom_call.1} parent=1 // pred_check
      _
    $region39: #{tpu_custom_call.1} parent=1 // pred_check_branch
      %343 = sbr.rel (0) target = $region41
    $region40: #{tpu_custom_call.1} parent=1 // pred_region
      %344 = dma.done [#allocation10], 768
    $region41: #{tpu_custom_call.1} parent=1 // pred_fallthru
      _
    %345 = vsyncpa [#allocation4], 1
    %346 = vsyncpa [#allocation7], 1
    %347 = vsyncpa [#allocation5], 1
    %348 = vsyncpa [#allocation10], 1

</llo_original>
